<compile_context>
chip_gen: v7x
topology: tpu7x:2x2x1
jax: 0.10.0
libtpu: 0.0.40
codegen_flags: <defaults>
</compile_context>

<pallas_src>
import jax
import jax.numpy as jnp
from jax.experimental import pallas as pl
from jax.experimental.pallas import tpu as pltpu


def _sse_kernel(var_ref, ab_ref, out_ref, acc_ref):
    """Per-row sum of squared differences, accumulated over the M-tile grid.

    Grid = (num_chunks [parallel], kc [arbitrary, reduction]).
    """
    k = pl.program_id(1)

    @pl.when(k == 0)
    def _():
        acc_ref[...] = jnp.zeros_like(acc_ref)

    d = var_ref[...].astype(jnp.float32) - ab_ref[...].astype(jnp.float32)
    acc_ref[...] += jnp.sum(d * d, axis=-1, keepdims=True)

    @pl.when(k == pl.num_programs(1) - 1)
    def _():
        out_ref[...] = acc_ref[...].astype(out_ref.dtype)


def _vmem_budget():
    """(per-input block byte budget, vmem_limit_bytes), generation-aware."""
    try:
        cap = pltpu.get_tpu_info().vmem_capacity_bytes
    except Exception:
        cap = 64 << 20  # conservative fallback (treat like v7x)
    if cap >= (96 << 20):
        # v5e / v6e: 128 MiB physical VMEM per TensorCore.
        return 4 << 20, 96 << 20
    # v7x: 64 MiB physical VMEM per TensorCore -> smaller tiles + limit.
    return 2 << 20, 44 << 20


def loss_forward(var, ab, *, num_chunks=2):
    """Pallas equivalent of Loss.forward.

    var, ab: arrays of shape (N, *item_shape) (the zip axis is axis 0).
    Returns: (N,) float32 vector of per-item sum-of-squared-errors.
    """
    assert var.shape == ab.shape
    n = var.shape[0]
    m = 1
    for s in var.shape[1:]:
        m *= s
    if m == 0:
        return jnp.zeros((n,), jnp.float32)

    # Flatten per-item tensors (row-major, same as torch's contiguous view).
    # NOTE: keep the native dtype -- the f32 cast happens inside the kernel so
    # bf16/fp16 inputs are streamed from HBM at their native width.
    var2 = var.reshape(n, m)
    ab2 = ab.reshape(n, m)
    itemsize = jnp.dtype(var2.dtype).itemsize

    block_budget, vmem_limit = _vmem_budget()

    # Largest lane-aligned tile that fits the per-input block budget.
    tile_m = max(128, (block_budget // (n * itemsize)) // 128 * 128)
    per_chunk = pl.cdiv(m, num_chunks)
    tile_m = min(tile_m, ((per_chunk + 127) // 128) * 128)
    kc = pl.cdiv(per_chunk, tile_m)          # reduction steps per chunk
    m_pad = num_chunks * kc * tile_m

    if m_pad != m:
        # Zero-padding both operands contributes exactly 0 to the SSE.
        pad = m_pad - m
        var2 = jnp.pad(var2, ((0, 0), (0, pad)))
        ab2 = jnp.pad(ab2, ((0, 0), (0, pad)))

    in_map = lambda c, k: (0, c * kc + k)

    partial = pl.pallas_call(
        _sse_kernel,
        out_shape=jax.ShapeDtypeStruct((num_chunks, n, 1), jnp.float32),
        grid_spec=pltpu.PrefetchScalarGridSpec(
            num_scalar_prefetch=0,
            grid=(num_chunks, kc),
            in_specs=[
                pl.BlockSpec((n, tile_m), in_map),
                pl.BlockSpec((n, tile_m), in_map),
            ],
            out_specs=pl.BlockSpec((None, n, 1), lambda c, k: (c, 0, 0)),
            scratch_shapes=[pltpu.VMEM((n, 1), jnp.float32)],
        ),
        compiler_params=pltpu.CompilerParams(
            dimension_semantics=("parallel", "arbitrary"),
            vmem_limit_bytes=vmem_limit,
        ),
    )(var2, ab2)

    # Combine the per-chunk partial sums (2 tiny rows) in the wrapper.
    return partial.reshape(num_chunks, n).sum(axis=0)


if __name__ == "__main__":
    key = jax.random.PRNGKey(0)
    k1, k2, k3, k4 = jax.random.split(key, 4)

    # N = 4 zipped items, each item a (8, 16, 16) tensor (M = 2048 per item).
    var = jax.random.normal(k1, (4, 8, 16, 16), dtype=jnp.float32)
    ab = jax.random.normal(k2, (4, 8, 16, 16), dtype=jnp.float32)

    out = loss_forward(var, ab)
    out = jax.block_until_ready(out)

    ref = jnp.sum((var - ab) ** 2, axis=(1, 2, 3))
    assert out.shape == (4,)
    assert jnp.allclose(out, ref, rtol=1e-5, atol=1e-4), (out, ref)

    # Second check: ragged M (not a multiple of 128) + bf16 inputs exercises
    # the zero-padding path and the native-dtype (no wrapper up-cast) path.
    var_b = jax.random.normal(k3, (3, 5, 7, 11), dtype=jnp.bfloat16)
    ab_b = jax.random.normal(k4, (3, 5, 7, 11), dtype=jnp.bfloat16)
    out_b = jax.block_until_ready(loss_forward(var_b, ab_b))
    df = var_b.astype(jnp.float32) - ab_b.astype(jnp.float32)
    ref_b = jnp.sum(df * df, axis=(1, 2, 3))
    assert out_b.shape == (3,)
    assert jnp.allclose(out_b, ref_b, rtol=1e-4, atol=1e-3), (out_b, ref_b)

    print("KERNEL_OK")
</pallas_src>

<mosaic_0001>
module attributes {stable_mosaic.version = 11 : i64} {
  func.func @_sse_kernel(%arg0: i32, %arg1: i32, %arg2: memref<4x1024xf32, #tpu.memory_space<vmem>>, %arg3: memref<4x1024xf32, #tpu.memory_space<vmem>>, %arg4: memref<1x4x1xf32, #tpu.memory_space<vmem>>, %arg5: memref<4x1xf32, #tpu.memory_space<vmem>>) attributes {dimension_semantics = [#tpu.dimension_semantics<parallel>, #tpu.dimension_semantics<arbitrary>], iteration_bounds = array<i64: 2, 1>, scalar_prefetch = 0 : i64, scratch_operands = 1 : i64, tpu.core_type = #tpu.core_type<tc>, window_params = [{transform_indices = @transform_0, window_bounds = array<i64: 4, 1024>}, {transform_indices = @transform_1, window_bounds = array<i64: 4, 1024>}, {transform_indices = @transform_2, window_bounds = array<i64: 1, 4, 1>}]} {
    %c0_i32 = arith.constant 0 : i32
    %0 = arith.cmpi eq, %arg1, %c0_i32 : i32
    %1 = arith.extui %0 : i1 to i32
    %c0_i32_0 = arith.constant 0 : i32
    %2 = arith.cmpi ne, %1, %c0_i32_0 : i32
    scf.if %2 {
      %cst_10 = arith.constant 0.000000e+00 : f32
      %15 = vector.broadcast %cst_10 : f32 to vector<4x1xf32>
      %c0_11 = arith.constant 0 : index
      %c0_12 = arith.constant 0 : index
      %16 = vector.load %arg5[%c0_11, %c0_12] : memref<4x1xf32, #tpu.memory_space<vmem>>, vector<4x1xf32>
      tpu.vector_store %arg5[%c0_11, %c0_12], %15 {strides = array<i32>} : memref<4x1xf32, #tpu.memory_space<vmem>>, vector<4x1xf32>,
    } else {
    }
    %c0 = arith.constant 0 : index
    %c0_1 = arith.constant 0 : index
    %3 = vector.load %arg2[%c0, %c0_1] : memref<4x1024xf32, #tpu.memory_space<vmem>>, vector<4x1024xf32>
    %c0_2 = arith.constant 0 : index
    %c0_3 = arith.constant 0 : index
    %4 = vector.load %arg3[%c0_2, %c0_3] : memref<4x1024xf32, #tpu.memory_space<vmem>>, vector<4x1024xf32>
    %5 = arith.subf %3, %4 : vector<4x1024xf32>
    %c0_4 = arith.constant 0 : index
    %c0_5 = arith.constant 0 : index
    %6 = vector.load %arg5[%c0_4, %c0_5] : memref<4x1xf32, #tpu.memory_space<vmem>>, vector<4x1xf32>
    %7 = arith.mulf %5, %5 : vector<4x1024xf32>
    %cst = arith.constant dense<0.000000e+00> : vector<4xf32>
    %8 = vector.multi_reduction <add>, %7, %cst [1] : vector<4x1024xf32> to vector<4xf32>
    %9 = vector.shape_cast %8 : vector<4xf32> to vector<4x1xf32>
    %10 = arith.addf %6, %9 : vector<4x1xf32>
    %c0_6 = arith.constant 0 : index
    %c0_7 = arith.constant 0 : index
    %11 = vector.load %arg5[%c0_6, %c0_7] : memref<4x1xf32, #tpu.memory_space<vmem>>, vector<4x1xf32>
    tpu.vector_store %arg5[%c0_6, %c0_7], %10 {strides = array<i32>} : memref<4x1xf32, #tpu.memory_space<vmem>>, vector<4x1xf32>,
    %c0_i32_8 = arith.constant 0 : i32
    %12 = arith.cmpi eq, %arg1, %c0_i32_8 : i32
    %13 = arith.extui %12 : i1 to i32
    %c0_i32_9 = arith.constant 0 : i32
    %14 = arith.cmpi ne, %13, %c0_i32_9 : i32
    scf.if %14 {
      %c0_10 = arith.constant 0 : index
      %c0_11 = arith.constant 0 : index
      %15 = vector.load %arg5[%c0_10, %c0_11] : memref<4x1xf32, #tpu.memory_space<vmem>>, vector<4x1xf32>
      %c0_12 = arith.constant 0 : index
      %c0_13 = arith.constant 0 : index
      %c0_14 = arith.constant 0 : index
      %16 = vector.load %arg4[%c0_12, %c0_13, %c0_14] : memref<1x4x1xf32, #tpu.memory_space<vmem>>, vector<1x4x1xf32>
      %17 = vector.shape_cast %16 : vector<1x4x1xf32> to vector<4x1xf32>
      %18 = vector.shape_cast %15 : vector<4x1xf32> to vector<1x4x1xf32>
      tpu.vector_store %arg4[%c0_12, %c0_13, %c0_14], %18 {strides = array<i32>} : memref<1x4x1xf32, #tpu.memory_space<vmem>>, vector<1x4x1xf32>,
    } else {
    }
    return
  }
  func.func @transform_0(%arg0: i32, %arg1: i32) -> (i32, i32) {
    %c1_i32 = arith.constant 1 : i32
    %0 = arith.muli %arg0, %c1_i32 : i32
    %1 = arith.addi %0, %arg1 : i32
    %c0_i32 = arith.constant 0 : i32
    %c0_i32_0 = arith.constant 0 : i32
    return %c0_i32, %1 : i32, i32
  }
  func.func @transform_1(%arg0: i32, %arg1: i32) -> (i32, i32) {
    %c1_i32 = arith.constant 1 : i32
    %0 = arith.muli %arg0, %c1_i32 : i32
    %1 = arith.addi %0, %arg1 : i32
    %c0_i32 = arith.constant 0 : i32
    %c0_i32_0 = arith.constant 0 : i32
    return %c0_i32, %1 : i32, i32
  }
  func.func @transform_2(%arg0: i32, %arg1: i32) -> (i32, i32, i32) {
    %c0_i32 = arith.constant 0 : i32
    %c0_i32_0 = arith.constant 0 : i32
    %c0_i32_1 = arith.constant 0 : i32
    return %arg0, %c0_i32, %c0_i32_0 : i32, i32, i32
  }
}

</mosaic_0001>

<llo_original>
// kernel: tpu_custom_call.1
$region0: #{tpu_custom_call.1}
  #allocation0 [shape = 'u32[]', space=smem, size = 0x4, offset = 0x4, fixed_abs, tag = 'smem constant byte address 0x4 - core index']
  #allocation1 [shape = 'u32[144,128]{1,0:T(1,128)}', space=vmem, size = 0x12000, scoped, tag = 'internal scratch']
  #allocation2 [shape = 'f32[4,1]{1,0:T(4,128)}', space=vmem, size = 0x800, scoped, tag = 'scratch operand']
  %s0 = inlined_call_operand.hbm [shape: f32[4,2048], index: 0, kind: input, shape index: {}]
  %s1 = inlined_call_operand.hbm [shape: f32[4,2048], index: 1, kind: input, shape index: {}]
  %s2 = inlined_call_operand.vmem [shape: f32[2,4,1], index: 2, kind: output, shape index: {}]
  %s3 = sld [smem:[#allocation0]]
  $region57: #{tpu_custom_call.1} parent=0
    _
  %s5 = ssub.s32 1, %s3
  %s6 = scalar_select 0, %s5, %s3
  $region1: #{tpu_custom_call.1} parent=0
    #allocation3 [shape = 'u8[32768]{0}', space=vmem, size = 0x8000, scoped, tag = 'input window, operand 0']
    #allocation4 [shape = 's32[2]{0}', space=sflag, size = 0x8, scoped, tag = 'scoped memory for tpu_custom_call.1']
    #allocation5 [shape = 'u8[32768]{0}', space=vmem, size = 0x8000, scoped, tag = 'input window, operand 1']
    #allocation6 [shape = 's32[2]{0}', space=sflag, size = 0x8, scoped, tag = 'scoped memory for tpu_custom_call.1']
    %7 = vsyncpa [#allocation4], 0
    %s8 = scalar_lea.sflag [#allocation4], 1
    %9 = vsyncpa %s8, 0
    %10 = vsyncpa [#allocation6], 0
    %s11 = scalar_lea.sflag [#allocation6], 1
    %12 = vsyncpa %s11, 0
    loop: start=0, step=1, limit=4
    $region2: #{tpu_custom_call.1} parent=1 // loop_pre_header
      _
    $region3: #{tpu_custom_call.1} parent=1 // loop_header
      %s14 = sphi 0, %s18
      %p15 = scmp.ge.s32.totalorder %s14, 4
      %s21 = sphi 0, %s33
      %s22 = sphi 0, %s29
      %s23 = sphi 0, %s21
      %s24 = sphi 0, %s22
      %s25 = sphi 0, %s23
      %s26 = sphi 0, %s24
      %s38 = sphi 0, %s40
      %s41 = sphi 0, %s38
      %s42 = sphi 0, %s41
      %s58 = sphi 0, %s42
      %s66 = sphi 0, %s68
      %s69 = sphi 0, %s66
      %s70 = sphi 0, %s69
      %s86 = sphi 0, %s70
      %s92 = sphi 0, %s94
      %s95 = sphi 0, %s92
      %s96 = sphi 0, %s95
      %s112 = sphi 0, %s96
    $region4: #{tpu_custom_call.1} parent=1 // loop_header_branch
      %17 = sbr.rel (%p15) target = $region8
    $region5: #{tpu_custom_call.1} parent=1 // loop_body
      %s19 = ssub.s32 %s14, 1
      %s20 = ssub.s32 %s14, 2
      %s27 = sadd.s32 1, %s22
      %p28 = scmp.ge.s32.totalorder %s27, 1
      %s29 = scalar_select %p28, 0, %s27
      %s30 = sadd.s32 1, %s21
      %s31 = scalar_select %p28, %s30, %s21
      %p32 = scmp.ge.s32.totalorder %s31, 2
      %s33 = scalar_select %p32, 0, %s31
      %s34 = sadd.s32 %s21, %s22
      %s35 = sadd.s32 %s33, %s29
      %s36 = ssub.s32 %s34, %s35
      %p37 = scmp.eq.s32.totalorder %s36, 0
      %s39 = sadd.s32 %s38, 1
      %s40 = scalar_select %p37, %s38, %s39
      %p43 = pneg %p37
      %p44 = scmp.eq.s32.totalorder %s14, 1
      %p45 = por %p43, %p44
      %p46 = scmp.ne.s32.totalorder %s38, %s41
      %p47 = scmp.eq.s32.totalorder %s14, 0
      %p48 = por %p46, %p47
      %p49 = scmp.ne.s32.totalorder %s38, %s41
      %p50 = scmp.eq.s32.totalorder %s19, 1
      %p51 = por %p49, %p50
      %p52 = scmp.ne.s32.totalorder %s41, %s42
      %p53 = scmp.eq.s32.totalorder %s19, 0
      %p54 = por %p52, %p53
      %p55 = scmp.ne.s32.totalorder %s41, %s42
      %p56 = scmp.eq.s32.totalorder %s20, 1
      %p57 = por %p55, %p56
      %p59 = scmp.ne.s32.totalorder %s42, %s58
      %p60 = scmp.eq.s32.totalorder %s20, 0
      %p61 = por %p59, %p60
      %s62 = sadd.s32 %s21, %s22
      %s63 = sadd.s32 %s33, %s29
      %s64 = ssub.s32 %s62, %s63
      %p65 = scmp.eq.s32.totalorder %s64, 0
      %s67 = sadd.s32 %s66, 1
      %s68 = scalar_select %p65, %s66, %s67
      %p71 = pneg %p65
      %p72 = scmp.eq.s32.totalorder %s14, 1
      %p73 = por %p71, %p72
      %p74 = scmp.ne.s32.totalorder %s66, %s69
      %p75 = scmp.eq.s32.totalorder %s14, 0
      %p76 = por %p74, %p75
      %p77 = scmp.ne.s32.totalorder %s66, %s69
      %p78 = scmp.eq.s32.totalorder %s19, 1
      %p79 = por %p77, %p78
      %p80 = scmp.ne.s32.totalorder %s69, %s70
      %p81 = scmp.eq.s32.totalorder %s19, 0
      %p82 = por %p80, %p81
      %p83 = scmp.ne.s32.totalorder %s69, %s70
      %p84 = scmp.eq.s32.totalorder %s20, 1
      %p85 = por %p83, %p84
      %p87 = scmp.ne.s32.totalorder %s70, %s86
      %p88 = scmp.eq.s32.totalorder %s20, 0
      %p89 = por %p87, %p88
      %s90 = ssub.s32 %s21, %s33
      %p91 = scmp.eq.s32.totalorder %s90, 0
      %s93 = sadd.s32 %s92, 1
      %s94 = scalar_select %p91, %s92, %s93
      %p97 = pneg %p91
      %p98 = scmp.eq.s32.totalorder %s14, 1
      %p99 = por %p97, %p98
      %p100 = scmp.ne.s32.totalorder %s92, %s95
      %p101 = scmp.eq.s32.totalorder %s14, 0
      %p102 = por %p100, %p101
      %p103 = scmp.ne.s32.totalorder %s92, %s95
      %p104 = scmp.eq.s32.totalorder %s19, 1
      %p105 = por %p103, %p104
      %p106 = scmp.ne.s32.totalorder %s95, %s96
      %p107 = scmp.eq.s32.totalorder %s19, 0
      %p108 = por %p106, %p107
      %p109 = scmp.ne.s32.totalorder %s95, %s96
      %p110 = scmp.eq.s32.totalorder %s20, 1
      %p111 = por %p109, %p110
      %p113 = scmp.ne.s32.totalorder %s96, %s112
      %p114 = scmp.eq.s32.totalorder %s20, 0
      %p115 = por %p113, %p114
      %p116 = scmp.le.s32.totalorder 1, %s14
      %p117 = scmp.lt.s32.totalorder %s14, 3
      %p118 = pnand %p116, %p117
      %p119 = pneg %p118
      // Predicated region
      $region9: #{tpu_custom_call.1} parent=5 // pred_check
        _
      $region10: #{tpu_custom_call.1} parent=5 // pred_check_branch
        %121 = sbr.rel (%p118) target = $region12
      $region11: #{tpu_custom_call.1} parent=5 // pred_region
        %s122 = ssub.s32 %s14, 1
      $region12: #{tpu_custom_call.1} parent=5 // pred_fallthru
        _
      %p123 = scmp.lt.s32.totalorder %s14, 2
      // Predicated region
      $region13: #{tpu_custom_call.1} parent=5 // pred_check
        %p124 = pneg %p123
      $region14: #{tpu_custom_call.1} parent=5 // pred_check_branch
        %126 = sbr.rel (%p124) target = $region16
      $region15: #{tpu_custom_call.1} parent=5 // pred_region
        // Predicated region
        $region17: #{tpu_custom_call.1} parent=15 // pred_check
          %p127 = pneg %p48
        $region18: #{tpu_custom_call.1} parent=15 // pred_check_branch
          %129 = sbr.rel (%p127) target = $region20
        $region19: #{tpu_custom_call.1} parent=15 // pred_region
          %s130 = sand.u32 %s38, 1
          %s131 = scalar_lea.sflag [#allocation4], %s130
          %s132 = sand.u32 %s38, 1
          %s133 = smul.addr %s132, 32
          %s134 = scalar_lea.vmem [#allocation3], %s133
          %s135 = sadd.s32 %s21, %s22
          %s136 = smul.u32 8, %s135
          %s138 = ssub.s32 512, 512
          %139 = vsyncadd %s131, %s138
          %s140 = smul.addr %s136, 64
          %s141 = scalar_lea.hbm %s0, %s140
          %s143 = sshll.u32 %s134, 4
          %s144 = int_to_ptr.vmem [resolvable:$true] %s143
          %146 = dma.hbm_to_vmem [thread:$0]  %s141, 512, %s144, %s131
        $region20: #{tpu_custom_call.1} parent=15 // pred_fallthru
          _
        // Predicated region
        $region21: #{tpu_custom_call.1} parent=15 // pred_check
          %p147 = pneg %p76
        $region22: #{tpu_custom_call.1} parent=15 // pred_check_branch
          %149 = sbr.rel (%p147) target = $region24
        $region23: #{tpu_custom_call.1} parent=15 // pred_region
          %s150 = sand.u32 %s66, 1
          %s151 = scalar_lea.sflag [#allocation6], %s150
          %s152 = sand.u32 %s66, 1
          %s153 = smul.addr %s152, 32
          %s154 = scalar_lea.vmem [#allocation5], %s153
          %s155 = sadd.s32 %s21, %s22
          %s156 = smul.u32 8, %s155
          %s158 = ssub.s32 512, 512
          %159 = vsyncadd %s151, %s158
          %s160 = smul.addr %s156, 64
          %s161 = scalar_lea.hbm %s1, %s160
          %s163 = sshll.u32 %s154, 4
          %s164 = int_to_ptr.vmem [resolvable:$true] %s163
          %166 = dma.hbm_to_vmem [thread:$0]  %s161, 512, %s164, %s151
        $region24: #{tpu_custom_call.1} parent=15 // pred_fallthru
          _
      $region16: #{tpu_custom_call.1} parent=5 // pred_fallthru
        _
      %p167 = scmp.le.s32.totalorder 1, %s14
      %p168 = scmp.lt.s32.totalorder %s14, 3
      %p169 = pnand %p167, %p168
      %p170 = pneg %p169
      // Predicated region
      $region25: #{tpu_custom_call.1} parent=5 // pred_check
        _
      $region26: #{tpu_custom_call.1} parent=5 // pred_check_branch
        %172 = sbr.rel (%p169) target = $region28
      $region27: #{tpu_custom_call.1} parent=5 // pred_region
        %s173 = ssub.s32 %s14, 1
        %s174 = sand.u32 %s41, 1
        %s175 = scalar_lea.sflag [#allocation4], %s174
        %s176 = sand.u32 %s41, 1
        %s177 = smul.addr %s176, 32
        %s178 = scalar_lea.vmem [#allocation3], %s177
        // Predicated region
        $region29: #{tpu_custom_call.1} parent=27 // pred_check
          %p179 = pneg %p54
        $region30: #{tpu_custom_call.1} parent=27 // pred_check_branch
          %181 = sbr.rel (%p179) target = $region32
        $region31: #{tpu_custom_call.1} parent=27 // pred_region
          %182 = dma.done %s175, 512
        $region32: #{tpu_custom_call.1} parent=27 // pred_fallthru
          _
        %s183 = sand.u32 %s69, 1
        %s184 = scalar_lea.sflag [#allocation6], %s183
        %s185 = sand.u32 %s69, 1
        %s186 = smul.addr %s185, 32
        %s187 = scalar_lea.vmem [#allocation5], %s186
        // Predicated region
        $region33: #{tpu_custom_call.1} parent=27 // pred_check
          %p188 = pneg %p82
        $region34: #{tpu_custom_call.1} parent=27 // pred_check_branch
          %190 = sbr.rel (%p188) target = $region36
        $region35: #{tpu_custom_call.1} parent=27 // pred_region
          %191 = dma.done %s184, 512
        $region36: #{tpu_custom_call.1} parent=27 // pred_fallthru
          _
        %s192 = sand.u32 %s41, 1
        %s193 = scalar_lea.sflag [#allocation4], %s192
        %s194 = sand.u32 %s41, 1
        %s195 = smul.addr %s194, 32
        %s196 = scalar_lea.vmem [#allocation3], %s195
        %p197 = pneg %p54
        %p198 = pneg %p51
        %s199 = sand.u32 %s69, 1
        %s200 = scalar_lea.sflag [#allocation6], %s199
        %s201 = sand.u32 %s69, 1
        %s202 = smul.addr %s201, 32
        %s203 = scalar_lea.vmem [#allocation5], %s202
        %p204 = pneg %p82
        %p205 = pneg %p79
        %p206 = pneg %p108
        %p207 = pneg %p105
        %p208 = scmp.lt.s32.totalorder %s23, 1
        %s209 = scalar_select %p208, %s23, 1
        %s210 = smul.addr %s209, 4
        %s211 = scalar_lea.vmem %s2, %s210
        %s212 = sadd.s32 %s23, %s24
        %s213 = smul.u32 8, %s212
        %s214 = sadd.s32 %s23, %s24
        %s215 = smul.u32 8, %s214
        %p216 = scmp.lt.s32.totalorder %s23, 1
        %s217 = scalar_select %p216, %s23, 1
        %s218 = smul.addr %s217, 4
        %s219 = scalar_lea.vmem %s2, %s218
        %p220 = scmp.eq.s32.totalorder %s24, 0
        // Predicated region
        $region37: #{tpu_custom_call.1} parent=27 // pred_check
          %p221 = pneg %p220
        $region38: #{tpu_custom_call.1} parent=27 // pred_check_branch
          %223 = sbr.rel (%p221) target = $region40
        $region39: #{tpu_custom_call.1} parent=27 // pred_region
          %vm224 = vcmask 3072
          %225 = vst.msk [vmem:[#allocation2] sm:$0xf] %vm224, 0.0
        $region40: #{tpu_custom_call.1} parent=27 // pred_fallthru
          _
        %v226 = vld [vmem:[%s178] sm:$0xff]
        %v227 = vld [vmem:[%s178 + $0x8] sm:$0xff]
        %v228 = vld [vmem:[%s178 + $0x10] sm:$0xff]
        %v229 = vld [vmem:[%s178 + $0x18] sm:$0xff]
        %v230 = vld [vmem:[%s187] sm:$0xff]
        %v231 = vld [vmem:[%s187 + $0x8] sm:$0xff]
        %v232 = vld [vmem:[%s187 + $0x10] sm:$0xff]
        %v233 = vld [vmem:[%s187 + $0x18] sm:$0xff]
        %v234 = vsub.f32 %v226, %v230
        %v235 = vsub.f32 %v227, %v231
        %v236 = vsub.f32 %v228, %v232
        %v237 = vsub.f32 %v229, %v233
        %v238 = vld [vmem:[#allocation2] sm:$0xf]
        %v239 = vmul.f32 %v234, %v234
        %v240 = vmul.f32 %v235, %v235
        %v241 = vmul.f32 %v236, %v236
        %v242 = vmul.f32 %v237, %v237
        %v247 = vcombine.high %v239, %v239
        %v248 = vcombine.high %v240, %v240
        %v249 = vcombine.high %v241, %v241
        %v250 = vcombine.high %v242, %v242
        %vm255 = vcmask 1043456
        %v256 = vsel %vm255, %v239, 0.0
        %v257 = vsel %vm255, %v247, 0.0
        %v258 = vadd.f32 %v256, %v257
        %v259 = vsel %vm255, %v240, 0.0
        %v260 = vadd.f32 %v258, %v259
        %v261 = vsel %vm255, %v248, 0.0
        %v262 = vadd.f32 %v260, %v261
        %v263 = vsel %vm255, %v241, 0.0
        %v264 = vadd.f32 %v262, %v263
        %v265 = vsel %vm255, %v249, 0.0
        %v266 = vadd.f32 %v264, %v265
        %v267 = vsel %vm255, %v242, 0.0
        %v268 = vadd.f32 %v266, %v267
        %v269 = vsel %vm255, %v250, 0.0
        %v270 = vadd.f32 %v268, %v269
        %271 = vadd.xlane.f32.xlu0 %v270
        %v272 = vpop.xlane.xlu0 %271
        %v273 = vadd.f32 %v238, %v272
        %vm274 = vcmask 3072
        %275 = vst.msk [vmem:[#allocation2] sm:$0xf] %vm274, %v273
        // Predicated region
        $region41: #{tpu_custom_call.1} parent=27 // pred_check
          %p276 = pneg %p220
        $region42: #{tpu_custom_call.1} parent=27 // pred_check_branch
          %278 = sbr.rel (%p276) target = $region44
        $region43: #{tpu_custom_call.1} parent=27 // pred_region
          %v279 = vld [vmem:[#allocation2] sm:$0xf]
          %280 = vst.msk [vmem:[%s219] sm:$0xf] %vm274, %v279
        $region44: #{tpu_custom_call.1} parent=27 // pred_fallthru
          _
        %p281 = scmp.lt.s32.totalorder %s23, 1
        %s282 = scalar_select %p281, %s23, 1
        %s283 = smul.addr %s282, 4
        %s284 = scalar_lea.vmem %s2, %s283
        // Predicated region
        $region45: #{tpu_custom_call.1} parent=27 // pred_check
          %p285 = pneg %p105
        $region46: #{tpu_custom_call.1} parent=27 // pred_check_branch
          %287 = sbr.rel (%p285) target = $region48
        $region47: #{tpu_custom_call.1} parent=27 // pred_region
          _
        $region48: #{tpu_custom_call.1} parent=27 // pred_fallthru
          _
      $region28: #{tpu_custom_call.1} parent=5 // pred_fallthru
        _
      %p288 = scmp.le.s32.totalorder 2, %s14
      // Predicated region
      $region49: #{tpu_custom_call.1} parent=5 // pred_check
        %p289 = pneg %p288
      $region50: #{tpu_custom_call.1} parent=5 // pred_check_branch
        %291 = sbr.rel (%p289) target = $region52
      $region51: #{tpu_custom_call.1} parent=5 // pred_region
        %s292 = ssub.s32 %s14, 2
        // Predicated region
        $region53: #{tpu_custom_call.1} parent=51 // pred_check
          %p293 = pneg %p111
        $region54: #{tpu_custom_call.1} parent=51 // pred_check_branch
          %295 = sbr.rel (%p293) target = $region56
        $region55: #{tpu_custom_call.1} parent=51 // pred_region
          %p296 = scmp.lt.s32.totalorder %s25, 1
          %s297 = scalar_select %p296, %s25, 1
          %s298 = smul.addr %s297, 4
          %s299 = scalar_lea.vmem %s2, %s298
        $region56: #{tpu_custom_call.1} parent=51 // pred_fallthru
          _
      $region52: #{tpu_custom_call.1} parent=5 // pred_fallthru
        _
    $region6: #{tpu_custom_call.1} parent=1 // loop_footer
      %s18 = sadd.s32 1, %s14
    $region7: #{tpu_custom_call.1} parent=1 // loop_footer_branch
      %13 = sbr.rel target = $region3
    $region8: #{tpu_custom_call.1} parent=1 // loop_exit
      _
    %300 = vsyncpa [#allocation4], 1
    %s301 = scalar_lea.sflag [#allocation4], 1
    %302 = vsyncpa %s301, 1
    %303 = vsyncpa [#allocation6], 1
    %s304 = scalar_lea.sflag [#allocation6], 1
    %305 = vsyncpa %s304, 1

</llo_original>
